<compile_context>
chip_gen: v7x
topology: tpu7x:2x2x1
jax: 0.10.0
libtpu: 0.0.40
codegen_flags: <defaults>
</compile_context>

<pallas_src>
import jax
import jax.numpy as jnp
from jax.experimental import pallas as pl
from jax.experimental.pallas import tpu as pltpu

F_IN = 100    # logical input features (matches nn.Linear(100, 128))
H = 128       # hidden width


def _mlp_kernel(x_ref, w1_ref, b1_ref, w2_ref, b2_ref, w3_ref, b3_ref, o_ref):
    # x tile arrives as f32 (TB, 100); cast to bf16 in-kernel so the wrapper never rewrites x in HBM.
    x = x_ref[...].astype(jnp.bfloat16)
    h1 = jnp.dot(x, w1_ref[...], preferred_element_type=jnp.float32) + b1_ref[...]
    # ReLU after the bf16 downcast (commutes with the cast; runs on half the vregs on v6e/v7x).
    h1 = jnp.maximum(h1.astype(jnp.bfloat16), 0)
    h2 = jnp.dot(h1, w2_ref[...], preferred_element_type=jnp.float32) + b2_ref[...]
    h2 = jnp.maximum(h2, 0.0)
    # Layer 3 has N=1: an N=1 MXU matvec costs ~a full MXU pass for ~1% of the FLOPs,
    # so do it on the VPU (elementwise mul) + XLU (lane reduce) instead. b3 is a scalar in SMEM.
    o_ref[...] = jnp.sum(h2 * w3_ref[...], axis=-1, keepdims=True) + b3_ref[0, 0]


def _vmem_estimate_bytes(tb):
    x_tiles = 2 * tb * F_IN * 4                       # double-buffered f32 x tile
    out_tiles = 2 * tb * 4                            # double-buffered (TB, 1) f32 output tile
    weights = 2 * (F_IN * H * 2 + H * H * 2 + 3 * H * 4 + 4)
    acts = 4 * tb * H * 4                             # generous: h1/h2 f32 + bf16 temporaries
    return x_tiles + out_tiles + weights + acts


def small_regress_network(x, params, *, block_b=2048):
    """Forward pass of SmallRegressNetwork.

    x: (B, 100) array (any float/int dtype; cast like `x.type(torch.float)` -> f32 here,
       bf16 MXU operands produced inside the kernel).
    params: dict with w1 (100,128), b1 (1,128), w2 (128,128), b2 (1,128), w3 (128,1), b3 (1,1)
            (weights already transposed to (in, out)).
    Returns (B, 1) float32.
    """
    B = x.shape[0]
    x = x.astype(jnp.float32)   # matches `x.type(torch.float)`; no host-side pad or bf16 cast

    # Batch tile: large enough to amortize the ~0.35 us/step grid overhead. With f32 in-kernel
    # reads a multiple of 8 rows suffices for the sublane tiling; no batch padding is performed —
    # the last grid block is partial and its OOB output rows are masked.
    TB = block_b
    if B < TB:
        TB = max(8, ((B + 7) // 8) * 8)
    grid = (pl.cdiv(B, TB),)

    w1 = params["w1"].astype(jnp.bfloat16)            # (100, 128), K padded internally by Mosaic
    w2 = params["w2"].astype(jnp.bfloat16)            # (128, 128)
    b1 = params["b1"].astype(jnp.float32)             # (1, 128)
    b2 = params["b2"].astype(jnp.float32)             # (1, 128)
    w3 = params["w3"].reshape(1, H).astype(jnp.float32)   # (1, 128) row for the VPU/XLU final layer
    b3 = params["b3"].reshape(1, 1).astype(jnp.float32)   # (1, 1) scalar -> SMEM

    const = lambda shape: pl.BlockSpec(shape, lambda i: (0, 0))  # weights stay VMEM-resident

    est = _vmem_estimate_bytes(TB)
    vmem_limit = None
    if est > 12 * 1024 * 1024:                        # only raise above the default scoped limit
        vmem_limit = min(2 * est, 48 * 1024 * 1024)   # leave headroom under v7x's 64 MiB physical

    # TODO(synk): on v7x, verify the batch grid shards across both TensorCores; if not, try
    # dimension_semantics=(pltpu.CORE_PARALLEL,) on the batch axis (no effect on v5e/v6e).
    out = pl.pallas_call(
        _mlp_kernel,
        out_shape=jax.ShapeDtypeStruct((B, 1), jnp.float32),
        grid=grid,
        in_specs=[
            pl.BlockSpec((TB, F_IN), lambda i: (i, 0)),   # x: batch-tiled, auto double-buffered
            const((F_IN, H)), const((1, H)),              # w1, b1
            const((H, H)),    const((1, H)),              # w2, b2
            const((1, H)),                                # w3 (row)
            pl.BlockSpec(memory_space=pltpu.MemorySpace.SMEM),  # b3 scalar
        ],
        # TODO(synk): (TB,1) output is a narrow masked store; output bytes are only 4 B/row so it is
        # left as-is unless profiling shows store/epilogue time (relayout to (1,TB) if it does).
        out_specs=pl.BlockSpec((TB, 1), lambda i: (i, 0)),
        compiler_params=pltpu.CompilerParams(
            dimension_semantics=("parallel",),
            vmem_limit_bytes=vmem_limit,
        ),
    )(x, w1, b1, w2, b2, w3, b3)
    return out


def init_params(key):
    """Deterministic init mimicking PyTorch nn.Linear default (U[-1/sqrt(fan_in), +1/sqrt(fan_in)]).

    Weights stored transposed: (in_features, out_features). Biases stored as (1, out_features).
    """
    def linear(k, fan_in, fan_out):
        kw, kb = jax.random.split(k)
        bound = 1.0 / jnp.sqrt(jnp.float32(fan_in))
        w = jax.random.uniform(kw, (fan_in, fan_out), jnp.float32, -bound, bound)
        b = jax.random.uniform(kb, (1, fan_out), jnp.float32, -bound, bound)
        return w, b

    k1, k2, k3 = jax.random.split(key, 3)
    w1, b1 = linear(k1, F_IN, H)
    w2, b2 = linear(k2, H, H)
    w3, b3 = linear(k3, H, 1)
    return {"w1": w1, "b1": b1, "w2": w2, "b2": b2, "w3": w3, "b3": b3}


def _reference_f32(x, p):
    x = x.astype(jnp.float32)
    h = jnp.maximum(x @ p["w1"] + p["b1"], 0.0)
    h = jnp.maximum(h @ p["w2"] + p["b2"], 0.0)
    return h @ p["w3"] + p["b3"]


def _reference_bf16(x, p):
    # Matches the kernel numerics: in-kernel bf16 cast, f32 accumulation, bf16 ReLU after downcast,
    # VPU/XLU final layer.
    xb = x.astype(jnp.float32).astype(jnp.bfloat16)
    h1 = jnp.dot(xb, p["w1"].astype(jnp.bfloat16), preferred_element_type=jnp.float32) + p["b1"]
    h1 = jnp.maximum(h1.astype(jnp.bfloat16), 0)
    h2 = jnp.dot(h1, p["w2"].astype(jnp.bfloat16), preferred_element_type=jnp.float32) + p["b2"]
    h2 = jnp.maximum(h2, 0.0)
    return (jnp.sum(h2 * p["w3"].reshape(1, -1), axis=-1, keepdims=True)
            + p["b3"].reshape(1, 1))


if __name__ == "__main__":
    key = jax.random.PRNGKey(0)
    k_params, k_x = jax.random.split(key)
    params = init_params(k_params)

    # Small shape consistent with the module (batch=8, features=100).
    B = 8
    x = jax.random.normal(k_x, (B, F_IN), jnp.float32)

    out = jax.block_until_ready(small_regress_network(x, params))
    assert out.shape == (B, 1), out.shape
    assert jnp.allclose(out, _reference_bf16(x, params), atol=1e-2, rtol=1e-2), \
        "mismatch vs bf16-matched reference"
    assert jnp.allclose(out, _reference_f32(x, params), atol=5e-2, rtol=5e-2), \
        "mismatch vs f32 reference"

    # Exercise the multi-tile grid path with a partial (unpadded) last block.
    B2 = 300
    x2 = jax.random.normal(jax.random.PRNGKey(1), (B2, F_IN), jnp.float32)
    out2 = jax.block_until_ready(small_regress_network(x2, params, block_b=128))
    assert out2.shape == (B2, 1), out2.shape
    assert jnp.allclose(out2, _reference_bf16(x2, params), atol=1e-2, rtol=1e-2), \
        "mismatch vs bf16-matched reference (multi-tile, partial last block)"

    print("KERNEL_OK")
</pallas_src>

<mosaic_0001>
module attributes {stable_mosaic.version = 11 : i64} {
  func.func @_mlp_kernel(%arg0: i32, %arg1: memref<8x100xf32, #tpu.memory_space<vmem>>, %arg2: memref<100x128xbf16, #tpu.memory_space<vmem>>, %arg3: memref<1x128xf32, #tpu.memory_space<vmem>>, %arg4: memref<128x128xbf16, #tpu.memory_space<vmem>>, %arg5: memref<1x128xf32, #tpu.memory_space<vmem>>, %arg6: memref<1x128xf32, #tpu.memory_space<vmem>>, %arg7: memref<1x1xf32, #tpu.memory_space<smem>>, %arg8: memref<8x1xf32, #tpu.memory_space<vmem>>) attributes {dimension_semantics = [#tpu.dimension_semantics<parallel>], iteration_bounds = array<i64: 1>, scalar_prefetch = 0 : i64, scratch_operands = 0 : i64, tpu.core_type = #tpu.core_type<tc>, window_params = [{transform_indices = @transform_0, window_bounds = array<i64: 8, 100>}, {pipeline_mode = #tpu.pipeline_mode<synchronous>, transform_indices = @transform_1, window_bounds = array<i64: 100, 128>}, {pipeline_mode = #tpu.pipeline_mode<synchronous>, transform_indices = @transform_2, window_bounds = array<i64: 1, 128>}, {pipeline_mode = #tpu.pipeline_mode<synchronous>, transform_indices = @transform_3, window_bounds = array<i64: 128, 128>}, {pipeline_mode = #tpu.pipeline_mode<synchronous>, transform_indices = @transform_4, window_bounds = array<i64: 1, 128>}, {pipeline_mode = #tpu.pipeline_mode<synchronous>, transform_indices = @transform_5, window_bounds = array<i64: 1, 128>}, {transform_indices = @transform_6, window_bounds = array<i64: 1, 1>}, {transform_indices = @transform_7, window_bounds = array<i64: 8, 1>}]} {
    %c0 = arith.constant 0 : index
    %c0_0 = arith.constant 0 : index
    %0 = vector.load %arg1[%c0, %c0_0] : memref<8x100xf32, #tpu.memory_space<vmem>>, vector<8x100xf32>
    %1 = arith.truncf %0 : vector<8x100xf32> to vector<8x100xbf16>
    %c0_1 = arith.constant 0 : index
    %c0_2 = arith.constant 0 : index
    %2 = vector.load %arg2[%c0_1, %c0_2] : memref<100x128xbf16, #tpu.memory_space<vmem>>, vector<100x128xbf16>
    %cst = arith.constant dense<0.000000e+00> : vector<8x128xf32>
    %3 = tpu.matmul %1, %2, %cst {dimension_numbers = #tpu.dot_dimension_numbers<[1], [0], [0], [1], [0, 0, 1, 1], [], []>} : vector<8x100xbf16>, vector<100x128xbf16>, vector<8x128xf32> -> vector<8x128xf32>
    %c0_3 = arith.constant 0 : index
    %c0_4 = arith.constant 0 : index
    %4 = vector.load %arg3[%c0_3, %c0_4] : memref<1x128xf32, #tpu.memory_space<vmem>>, vector<1x128xf32>
    %5 = vector.broadcast %4 : vector<1x128xf32> to vector<8x128xf32>
    %6 = arith.addf %3, %5 : vector<8x128xf32>
    %7 = arith.truncf %6 : vector<8x128xf32> to vector<8x128xbf16>
    %cst_5 = arith.constant 0.000000e+00 : bf16
    %8 = vector.broadcast %cst_5 : bf16 to vector<8x128xbf16>
    %9 = arith.maximumf %7, %8 : vector<8x128xbf16>
    %c0_6 = arith.constant 0 : index
    %c0_7 = arith.constant 0 : index
    %10 = vector.load %arg4[%c0_6, %c0_7] : memref<128x128xbf16, #tpu.memory_space<vmem>>, vector<128x128xbf16>
    %cst_8 = arith.constant dense<0.000000e+00> : vector<8x128xf32>
    %11 = tpu.matmul %9, %10, %cst_8 {dimension_numbers = #tpu.dot_dimension_numbers<[1], [0], [0], [1], [0, 0, 1, 1], [], []>} : vector<8x128xbf16>, vector<128x128xbf16>, vector<8x128xf32> -> vector<8x128xf32>
    %c0_9 = arith.constant 0 : index
    %c0_10 = arith.constant 0 : index
    %12 = vector.load %arg5[%c0_9, %c0_10] : memref<1x128xf32, #tpu.memory_space<vmem>>, vector<1x128xf32>
    %13 = vector.broadcast %12 : vector<1x128xf32> to vector<8x128xf32>
    %14 = arith.addf %11, %13 : vector<8x128xf32>
    %cst_11 = arith.constant 0.000000e+00 : f32
    %15 = vector.broadcast %cst_11 : f32 to vector<8x128xf32>
    %16 = arith.maximumf %14, %15 : vector<8x128xf32>
    %c0_12 = arith.constant 0 : index
    %c0_13 = arith.constant 0 : index
    %17 = vector.load %arg6[%c0_12, %c0_13] : memref<1x128xf32, #tpu.memory_space<vmem>>, vector<1x128xf32>
    %18 = vector.broadcast %17 : vector<1x128xf32> to vector<8x128xf32>
    %19 = arith.mulf %16, %18 : vector<8x128xf32>
    %cst_14 = arith.constant dense<0.000000e+00> : vector<8xf32>
    %20 = vector.multi_reduction <add>, %19, %cst_14 [1] : vector<8x128xf32> to vector<8xf32>
    %21 = vector.shape_cast %20 : vector<8xf32> to vector<8x1xf32>
    %c0_15 = arith.constant 0 : index
    %c0_16 = arith.constant 0 : index
    %22 = memref.load %arg7[%c0_15, %c0_16] : memref<1x1xf32, #tpu.memory_space<smem>>
    %23 = vector.broadcast %22 : f32 to vector<8x1xf32>
    %24 = arith.addf %21, %23 : vector<8x1xf32>
    %c0_17 = arith.constant 0 : index
    %c0_18 = arith.constant 0 : index
    %25 = vector.load %arg8[%c0_17, %c0_18] : memref<8x1xf32, #tpu.memory_space<vmem>>, vector<8x1xf32>
    tpu.vector_store %arg8[%c0_17, %c0_18], %24 {strides = array<i32>} : memref<8x1xf32, #tpu.memory_space<vmem>>, vector<8x1xf32>,
    return
  }
  func.func @transform_0(%arg0: i32) -> (i32, i32) {
    %c0_i32 = arith.constant 0 : i32
    %c0_i32_0 = arith.constant 0 : i32
    return %arg0, %c0_i32 : i32, i32
  }
  func.func @transform_1(%arg0: i32) -> (i32, i32) {
    %c0_i32 = arith.constant 0 : i32
    %c0_i32_0 = arith.constant 0 : i32
    %c0_i32_1 = arith.constant 0 : i32
    return %c0_i32, %c0_i32_0 : i32, i32
  }
  func.func @transform_2(%arg0: i32) -> (i32, i32) {
    %c0_i32 = arith.constant 0 : i32
    %c0_i32_0 = arith.constant 0 : i32
    %c0_i32_1 = arith.constant 0 : i32
    return %c0_i32, %c0_i32_0 : i32, i32
  }
  func.func @transform_3(%arg0: i32) -> (i32, i32) {
    %c0_i32 = arith.constant 0 : i32
    %c0_i32_0 = arith.constant 0 : i32
    %c0_i32_1 = arith.constant 0 : i32
    return %c0_i32, %c0_i32_0 : i32, i32
  }
  func.func @transform_4(%arg0: i32) -> (i32, i32) {
    %c0_i32 = arith.constant 0 : i32
    %c0_i32_0 = arith.constant 0 : i32
    %c0_i32_1 = arith.constant 0 : i32
    return %c0_i32, %c0_i32_0 : i32, i32
  }
  func.func @transform_5(%arg0: i32) -> (i32, i32) {
    %c0_i32 = arith.constant 0 : i32
    %c0_i32_0 = arith.constant 0 : i32
    %c0_i32_1 = arith.constant 0 : i32
    return %c0_i32, %c0_i32_0 : i32, i32
  }
  func.func @transform_6(%arg0: i32) -> (i32, i32) {
    %c0_i32 = arith.constant 0 : i32
    %c0_i32_0 = arith.constant 0 : i32
    %c0_i32_1 = arith.constant 0 : i32
    return %c0_i32, %c0_i32_0 : i32, i32
  }
  func.func @transform_7(%arg0: i32) -> (i32, i32) {
    %c0_i32 = arith.constant 0 : i32
    %c0_i32_0 = arith.constant 0 : i32
    return %arg0, %c0_i32 : i32, i32
  }
}

</mosaic_0001>

<llo_original>
// kernel: tpu_custom_call.1
$region0: #{tpu_custom_call.1}
  #allocation0 [shape = 'u32[]', space=smem, size = 0x4, offset = 0x4, fixed_abs, tag = 'smem constant byte address 0x4 - core index']
  #allocation1 [shape = 'u32[144,128]{1,0:T(1,128)}', space=vmem, size = 0x12000, scoped, tag = 'internal scratch']
  #allocation2 [shape = 'f32[1,1]{1,0:T(1,128)S(6)}', space=smem, size = 0x200, scoped, tag = 'scoped memory for tpu_custom_call.1']
  %s0 = inlined_call_operand.hbm [shape: f32[8,100], index: 0, kind: input, shape index: {}]
  %s1 = inlined_call_operand.hbm [shape: bf16[100,128], index: 1, kind: input, shape index: {}]
  %s2 = inlined_call_operand.vmem [shape: f32[1,128], index: 2, kind: input, shape index: {}]
  %s3 = inlined_call_operand.hbm [shape: bf16[128,128], index: 3, kind: input, shape index: {}]
  %s4 = inlined_call_operand.vmem [shape: f32[1,128], index: 4, kind: input, shape index: {}]
  %s5 = inlined_call_operand.vmem [shape: f32[1,128], index: 5, kind: input, shape index: {}]
  %s6 = inlined_call_operand.<no memory space> [shape: f32[1,1], index: 6, kind: input, shape index: {}]
  %s7 = inlined_call_operand.vmem [shape: f32[8,1], index: 7, kind: output, shape index: {}]
  %s8 = sld [smem:[#allocation0]]
  $region50: #{tpu_custom_call.1} parent=0
    _
  %s10 = ssub.s32 1, %s8
  %s11 = scalar_select 0, %s10, %s8
  %12 = sst [smem:[#allocation2]] %s6
  $region1: #{tpu_custom_call.1} parent=0
    #allocation3 [shape = 'u8[4096]{0}', space=vmem, size = 0x1000, scoped, tag = 'input window, operand 0, single buffered']
    #allocation4 [shape = 's32[1]{0}', space=sflag, size = 0x4, scoped, tag = 'scoped memory for tpu_custom_call.1']
    #allocation5 [shape = 'u8[26624]{0}', space=vmem, size = 0x6800, scoped, tag = 'input window, operand 1, single buffered']
    #allocation6 [shape = 's32[1]{0}', space=sflag, size = 0x4, scoped, tag = 'scoped memory for tpu_custom_call.1']
    #allocation7 [shape = 'u8[32768]{0}', space=vmem, size = 0x8000, scoped, tag = 'input window, operand 3, single buffered']
    %13 = vsyncpa [#allocation4], 0
    %14 = vsyncpa [#allocation6], 0
    // Predicated region
    $region2: #{tpu_custom_call.1} parent=1 // pred_check
      _
    $region3: #{tpu_custom_call.1} parent=1 // pred_check_branch
      %16 = sbr.rel (0) target = $region5
    $region4: #{tpu_custom_call.1} parent=1 // pred_region
      %s18 = ssub.s32 128, 128
      %19 = vsyncadd [#allocation4], %s18
      %s21 = sshll.u32 [#allocation3], 4
      %s22 = int_to_ptr.vmem [resolvable:$true] %s21
      %24 = dma.hbm_to_vmem [thread:$0]  %s0, 128, %s22, [#allocation4]
    $region5: #{tpu_custom_call.1} parent=1 // pred_fallthru
      _
    // Predicated region
    $region6: #{tpu_custom_call.1} parent=1 // pred_check
      _
    $region7: #{tpu_custom_call.1} parent=1 // pred_check_branch
      %26 = sbr.rel (0) target = $region9
    $region8: #{tpu_custom_call.1} parent=1 // pred_region
      %s28 = ssub.s32 832, 832
      %29 = vsyncadd [#allocation6], %s28
      %s30 = sshll.u32 [#allocation5], 4
      %s31 = int_to_ptr.vmem [resolvable:$true] %s30
      %36 = dma.hbm_to_vmem [thread:$0]  %s1, 832, %s31, [#allocation6], 64, 64, 4
    $region9: #{tpu_custom_call.1} parent=1 // pred_fallthru
      _
    // Predicated region
    $region10: #{tpu_custom_call.1} parent=1 // pred_check
      _
    $region11: #{tpu_custom_call.1} parent=1 // pred_check_branch
      %38 = sbr.rel (0) target = $region13
    $region12: #{tpu_custom_call.1} parent=1 // pred_region
      _
    $region13: #{tpu_custom_call.1} parent=1 // pred_fallthru
      _
    // Predicated region
    $region14: #{tpu_custom_call.1} parent=1 // pred_check
      _
    $region15: #{tpu_custom_call.1} parent=1 // pred_check_branch
      %40 = sbr.rel (0) target = $region17
    $region16: #{tpu_custom_call.1} parent=1 // pred_region
      %s42 = ssub.s32 1024, 1024
      %43 = vsyncadd [#allocation6], %s42
      %s44 = sshll.u32 [#allocation7], 4
      %s45 = int_to_ptr.vmem [resolvable:$true] %s44
      %50 = dma.hbm_to_vmem [thread:$0]  %s3, 1024, %s45, [#allocation6], 64, 64, 4
    $region17: #{tpu_custom_call.1} parent=1 // pred_fallthru
      _
    // Predicated region
    $region18: #{tpu_custom_call.1} parent=1 // pred_check
      _
    $region19: #{tpu_custom_call.1} parent=1 // pred_check_branch
      %52 = sbr.rel (0) target = $region21
    $region20: #{tpu_custom_call.1} parent=1 // pred_region
      _
    $region21: #{tpu_custom_call.1} parent=1 // pred_fallthru
      _
    // Predicated region
    $region22: #{tpu_custom_call.1} parent=1 // pred_check
      _
    $region23: #{tpu_custom_call.1} parent=1 // pred_check_branch
      %54 = sbr.rel (0) target = $region25
    $region24: #{tpu_custom_call.1} parent=1 // pred_region
      _
    $region25: #{tpu_custom_call.1} parent=1 // pred_fallthru
      _
    // Predicated region
    $region26: #{tpu_custom_call.1} parent=1 // pred_check
      _
    $region27: #{tpu_custom_call.1} parent=1 // pred_check_branch
      %56 = sbr.rel (0) target = $region29
    $region28: #{tpu_custom_call.1} parent=1 // pred_region
      _
    $region29: #{tpu_custom_call.1} parent=1 // pred_fallthru
      _
    // Predicated region
    $region30: #{tpu_custom_call.1} parent=1 // pred_check
      _
    $region31: #{tpu_custom_call.1} parent=1 // pred_check_branch
      %58 = sbr.rel (0) target = $region33
    $region32: #{tpu_custom_call.1} parent=1 // pred_region
      %59 = dma.done [#allocation4], 128
    $region33: #{tpu_custom_call.1} parent=1 // pred_fallthru
      _
    // Predicated region
    $region34: #{tpu_custom_call.1} parent=1 // pred_check
      _
    $region35: #{tpu_custom_call.1} parent=1 // pred_check_branch
      %61 = sbr.rel (0) target = $region37
    $region36: #{tpu_custom_call.1} parent=1 // pred_region
      %62 = dma.done [#allocation6], 832
    $region37: #{tpu_custom_call.1} parent=1 // pred_fallthru
      _
    // Predicated region
    $region38: #{tpu_custom_call.1} parent=1 // pred_check
      _
    $region39: #{tpu_custom_call.1} parent=1 // pred_check_branch
      %64 = sbr.rel (0) target = $region41
    $region40: #{tpu_custom_call.1} parent=1 // pred_region
      %65 = dma.done [#allocation6], 1024
    $region41: #{tpu_custom_call.1} parent=1 // pred_fallthru
      _
    %v67 = vld [vmem:[#allocation3] sm:$0xff]
    %v68 = vpack.c.bf16 %v67, %v67
    %v69 = vld [vmem:[#allocation5] sm:$0xf]
    %v70 = vld [vmem:[#allocation5 + $0x4] sm:$0xf]
    %v71 = vld [vmem:[#allocation5 + $0x8] sm:$0xf]
    %v72 = vld [vmem:[#allocation5 + $0xc] sm:$0xf]
    %v73 = vld [vmem:[#allocation5 + $0x10] sm:$0xf]
    %v74 = vld [vmem:[#allocation5 + $0x14] sm:$0xf]
    %v75 = vld [vmem:[#allocation5 + $0x18] sm:$0xf]
    %v76 = vld [vmem:[#allocation5 + $0x1c] sm:$0xf]
    %v77 = vld [vmem:[#allocation5 + $0x20] sm:$0xf]
    %v78 = vld [vmem:[#allocation5 + $0x24] sm:$0xf]
    %v79 = vld [vmem:[#allocation5 + $0x28] sm:$0xf]
    %v80 = vld [vmem:[#allocation5 + $0x2c] sm:$0xf]
    %v81 = vld [vmem:[#allocation5 + $0x30] sm:$0x3]
    %v82 = vld [vmem:[%s2] sm:$0x1]
    %v84 = vlaneseq
    %v85 = vshrl.u32 %v84, 7
    %v86 = vsub.s32 0, %v85
    %v87 = vrot.slane %v82, %v86
    %v102 = vunpack.c.l.b16 %v69
    %v103 = vunpack.c.l.b16 %v70
    %v104 = vunpack.c.l.b16 %v71
    %v105 = vunpack.c.l.b16 %v72
    %v106 = vunpack.c.l.b16 %v73
    %v107 = vunpack.c.l.b16 %v74
    %v108 = vunpack.c.l.b16 %v75
    %v109 = vunpack.c.l.b16 %v76
    %v110 = vunpack.c.l.b16 %v77
    %v111 = vunpack.c.l.b16 %v78
    %v112 = vunpack.c.l.b16 %v79
    %v113 = vunpack.c.l.b16 %v80
    %v114 = vunpack.c.l.b16 %v81
    %v115 = vpack.c.b16 %v103, %v102
    %v116 = vpack.c.b16 %v105, %v104
    %v117 = vpack.c.b16 %v107, %v106
    %v118 = vpack.c.b16 %v109, %v108
    %v119 = vpack.c.b16 %v111, %v110
    %v120 = vpack.c.b16 %v113, %v112
    %v121 = vpack.c.b16 %v114, %v114
    %vm128 = vcmask 818176
    %v130 = vsel %vm128, %v68, 0
    %vm132 = vcmask 1041408
    %v134 = vsel %vm132, %v121, 0
    %136 = vmatprep.subr.bf16.mxu0 0
    %137 = vmatpush1.bf16.msra.mxu0 %v115
    %138 = vmatprep.subr.bf16.mxu0 0
    %139 = vmatpush1.bf16.msra.mxu0 %v116
    %140 = vmatprep.subr.bf16.mxu0 0
    %141 = vmatpush1.bf16.msra.mxu0 %v117
    %142 = vmatprep.subr.bf16.mxu0 0
    %143 = vmatpush1.bf16.msra.mxu0 %v118
    %144 = vmatprep.subr.bf16.mxu0 0
    %145 = vmatpush1.bf16.msra.mxu0 %v119
    %146 = vmatprep.subr.bf16.mxu0 0
    %147 = vmatpush1.bf16.msra.mxu0 %v120
    %148 = vmatprep.subr.bf16.mxu0 0
    %149 = vmatpush1.bf16.msra.mxu0 %v134
    %150 = vmatprep.subr.bf16.mxu0 0
    %151 = vmatpush1.bf16.msra.mxu0 0
    %152 = vmatprep.subr.bf16.mxu0 0
    %153 = vmatpush1.bf16.msra.mxu0 0
    %154 = vmatprep.subr.bf16.mxu0 0
    %155 = vmatpush1.bf16.msra.mxu0 0
    %156 = vmatprep.subr.bf16.mxu0 0
    %157 = vmatpush1.bf16.msra.mxu0 0
    %158 = vmatprep.subr.bf16.mxu0 0
    %159 = vmatpush1.bf16.msra.mxu0 0
    %160 = vmatprep.subr.bf16.mxu0 0
    %161 = vmatpush1.bf16.msra.mxu0 0
    %162 = vmatprep.subr.bf16.mxu0 0
    %163 = vmatpush1.bf16.msra.mxu0 0
    %164 = vmatprep.subr.bf16.mxu0 0
    %165 = vmatpush1.bf16.msra.mxu0 0
    %166 = vmatprep.subr.bf16.mxu0 0
    %167 = vmatpush1.bf16.msra.mxu0 0
    %168 = vmatprep.mubr.bf16.mxu0 0
    %169 = vmatmul.mubr.bf16.gmra.mrb[0].mxu0 %v130
    %v170 = vpop.f32.mrb[0].mxu0
    %v171 = vadd.f32 %v87, %v170
    %v172 = vpop.f32.mrb[0].mxu0
    %v173 = vpop.f32.mrb[0].mxu0
    %v174 = vpop.f32.mrb[0].mxu0
    %175 = vdwg.mxu0
    %v176 = vpack.c.bf16 %v171, %v171
    %v177 = vmax.bf16 %v176, 0
    %v178 = vld [vmem:[#allocation7] sm:$0xf]
    %v179 = vld [vmem:[#allocation7 + $0x4] sm:$0xf]
    %v180 = vld [vmem:[#allocation7 + $0x8] sm:$0xf]
    %v181 = vld [vmem:[#allocation7 + $0xc] sm:$0xf]
    %v182 = vld [vmem:[#allocation7 + $0x10] sm:$0xf]
    %v183 = vld [vmem:[#allocation7 + $0x14] sm:$0xf]
    %v184 = vld [vmem:[#allocation7 + $0x18] sm:$0xf]
    %v185 = vld [vmem:[#allocation7 + $0x1c] sm:$0xf]
    %v186 = vld [vmem:[#allocation7 + $0x20] sm:$0xf]
    %v187 = vld [vmem:[#allocation7 + $0x24] sm:$0xf]
    %v188 = vld [vmem:[#allocation7 + $0x28] sm:$0xf]
    %v189 = vld [vmem:[#allocation7 + $0x2c] sm:$0xf]
    %v190 = vld [vmem:[#allocation7 + $0x30] sm:$0xf]
    %v191 = vld [vmem:[#allocation7 + $0x34] sm:$0xf]
    %v192 = vld [vmem:[#allocation7 + $0x38] sm:$0xf]
    %v193 = vld [vmem:[#allocation7 + $0x3c] sm:$0xf]
    %v194 = vld [vmem:[%s4] sm:$0x1]
    %v196 = vlaneseq
    %v197 = vshrl.u32 %v196, 7
    %v198 = vsub.s32 0, %v197
    %v199 = vrot.slane %v194, %v198
    %v217 = vunpack.c.l.b16 %v178
    %v218 = vunpack.c.l.b16 %v179
    %v219 = vunpack.c.l.b16 %v180
    %v220 = vunpack.c.l.b16 %v181
    %v221 = vunpack.c.l.b16 %v182
    %v222 = vunpack.c.l.b16 %v183
    %v223 = vunpack.c.l.b16 %v184
    %v224 = vunpack.c.l.b16 %v185
    %v225 = vunpack.c.l.b16 %v186
    %v226 = vunpack.c.l.b16 %v187
    %v227 = vunpack.c.l.b16 %v188
    %v228 = vunpack.c.l.b16 %v189
    %v229 = vunpack.c.l.b16 %v190
    %v230 = vunpack.c.l.b16 %v191
    %v231 = vunpack.c.l.b16 %v192
    %v232 = vunpack.c.l.b16 %v193
    %v233 = vpack.c.b16 %v218, %v217
    %v234 = vpack.c.b16 %v220, %v219
    %v235 = vpack.c.b16 %v222, %v221
    %v236 = vpack.c.b16 %v224, %v223
    %v237 = vpack.c.b16 %v226, %v225
    %v238 = vpack.c.b16 %v228, %v227
    %v239 = vpack.c.b16 %v230, %v229
    %v240 = vpack.c.b16 %v232, %v231
    %249 = vmatprep.subr.bf16.mxu0 0
    %250 = vmatpush1.bf16.msra.mxu0 %v233
    %251 = vmatprep.subr.bf16.mxu0 0
    %252 = vmatpush1.bf16.msra.mxu0 %v234
    %253 = vmatprep.subr.bf16.mxu0 0
    %254 = vmatpush1.bf16.msra.mxu0 %v235
    %255 = vmatprep.subr.bf16.mxu0 0
    %256 = vmatpush1.bf16.msra.mxu0 %v236
    %257 = vmatprep.subr.bf16.mxu0 0
    %258 = vmatpush1.bf16.msra.mxu0 %v237
    %259 = vmatprep.subr.bf16.mxu0 0
    %260 = vmatpush1.bf16.msra.mxu0 %v238
    %261 = vmatprep.subr.bf16.mxu0 0
    %262 = vmatpush1.bf16.msra.mxu0 %v239
    %263 = vmatprep.subr.bf16.mxu0 0
    %264 = vmatpush1.bf16.msra.mxu0 %v240
    %265 = vmatprep.subr.bf16.mxu0 0
    %266 = vmatpush1.bf16.msra.mxu0 0
    %267 = vmatprep.subr.bf16.mxu0 0
    %268 = vmatpush1.bf16.msra.mxu0 0
    %269 = vmatprep.subr.bf16.mxu0 0
    %270 = vmatpush1.bf16.msra.mxu0 0
    %271 = vmatprep.subr.bf16.mxu0 0
    %272 = vmatpush1.bf16.msra.mxu0 0
    %273 = vmatprep.subr.bf16.mxu0 0
    %274 = vmatpush1.bf16.msra.mxu0 0
    %275 = vmatprep.subr.bf16.mxu0 0
    %276 = vmatpush1.bf16.msra.mxu0 0
    %277 = vmatprep.subr.bf16.mxu0 0
    %278 = vmatpush1.bf16.msra.mxu0 0
    %279 = vmatprep.subr.bf16.mxu0 0
    %280 = vmatpush1.bf16.msra.mxu0 0
    %281 = vmatprep.mubr.bf16.mxu0 0
    %282 = vmatmul.mubr.bf16.gmra.mrb[0].mxu0 %v177
    %v283 = vpop.f32.mrb[0].mxu0
    %v284 = vadd.f32 %v199, %v283
    %v285 = vpop.f32.mrb[0].mxu0
    %v286 = vpop.f32.mrb[0].mxu0
    %v287 = vpop.f32.mrb[0].mxu0
    %288 = vdwg.mxu0
    %v289 = vmax.f32 %v284, 0.0
    %v290 = vld [vmem:[%s5] sm:$0x1]
    %v292 = vlaneseq
    %v293 = vshrl.u32 %v292, 7
    %v294 = vsub.s32 0, %v293
    %v295 = vrot.slane %v290, %v294
    %v297 = vmul.f32 %v289, %v295
    %298 = vadd.xlane.f32.xlu0 %v297
    %v299 = vpop.xlane.xlu0 %298
    %s300 = sld [smem:[#allocation2]]
    %v301 = vstv %s300
    %v302 = vadd.f32 %v299, %v301
    %vm303 = vcmask 7168
    %304 = vst.msk [vmem:[%s7] sm:$0xff] %vm303, %v302
    // Predicated region
    $region42: #{tpu_custom_call.1} parent=1 // pred_check
      _
    $region43: #{tpu_custom_call.1} parent=1 // pred_check_branch
      %306 = sbr.rel (0) target = $region45
    $region44: #{tpu_custom_call.1} parent=1 // pred_region
      _
    $region45: #{tpu_custom_call.1} parent=1 // pred_fallthru
      _
    // Predicated region
    $region46: #{tpu_custom_call.1} parent=1 // pred_check
      _
    $region47: #{tpu_custom_call.1} parent=1 // pred_check_branch
      %308 = sbr.rel (0) target = $region49
    $region48: #{tpu_custom_call.1} parent=1 // pred_region
      _
    $region49: #{tpu_custom_call.1} parent=1 // pred_fallthru
      _
    %309 = vsyncpa [#allocation4], 1
    %310 = vsyncpa [#allocation6], 1

</llo_original>
